<compile_context>
chip_gen: v5e
topology: v5e:2x2
jax: 0.10.0
libtpu: 0.0.40
codegen_flags: <defaults>
</compile_context>

<pallas_src>
import math

import jax
import jax.numpy as jnp
from jax.experimental import pallas as pl
from jax.experimental.pallas import tpu as pltpu


# ---------------------------------------------------------------------------
# __init__-equivalent: sinusoidal table (plain JAX, computed once).
# ---------------------------------------------------------------------------
def generate_encoding(d_model: int, max_len: int = 5000) -> jnp.ndarray:
    """Deterministic sinusoidal table, identical to the PyTorch __init__."""
    assert d_model % 2 == 0, "d_model must be even (sin/cos interleave)"
    position = jnp.arange(0, max_len, dtype=jnp.float32)[:, None]          # (max_len, 1)
    div_term = jnp.exp(
        jnp.arange(0, d_model, 2, dtype=jnp.float32) * -(math.log(10000.0) / d_model)
    )                                                                      # (d_model//2,)
    angles = position * div_term                                           # (max_len, d_model//2)
    enc = jnp.zeros((max_len, d_model), dtype=jnp.float32)
    enc = enc.at[:, 0::2].set(jnp.sin(angles))
    enc = enc.at[:, 1::2].set(jnp.cos(angles))
    return enc                                                             # (max_len, d_model)


# ---------------------------------------------------------------------------
# Kernels (pure elementwise add; VPU-only, mem-bound).
# ---------------------------------------------------------------------------
def _add_flat_kernel(x_ref, enc_ref, o_ref):
    # Lane-dense path. x_ref/o_ref: (bb, tn); enc_ref: (1, tn) broadcast over
    # the bb batch rows of this block (each row gets the same flattened slice
    # of the (S, D) encoding slab).
    o_ref[...] = x_ref[...] + enc_ref[...]


def _add_seq_kernel(x_ref, enc_ref, o_ref):
    # Fallback path. Batch block dim is squeezed away, so all refs are
    # (ts, D): rank-matched add, no per-step broadcast_in_dim.
    o_ref[...] = x_ref[...] + enc_ref[...]


# ---------------------------------------------------------------------------
# Tile selection (VMEM-budget aware; (8,128) block rules respected).
# ---------------------------------------------------------------------------
_LANE = 128
_SUBLANE = 8
_TARGET_BLOCK_BYTES = 1 << 20          # ~1 MiB of payload per x block
_VMEM_LIMIT_BYTES = 32 * 1024 * 1024   # explicit; safe on v5e/v6e/v7x


def _round_down(v: int, m: int) -> int:
    return (v // m) * m


def _pick_flat_tiles(B: int, N: int, itemsize: int):
    """Pick (bb, tn) block for the lane-dense (B, N) layout."""
    target_elems = max(_LANE, _TARGET_BLOCK_BYTES // itemsize)

    if B * N <= target_elems:
        return B, N                                    # single block covers all

    rows_wanted = max(1, target_elems // N)
    if rows_wanted >= B or B <= _SUBLANE:
        bb = B                                         # == full dim: always legal
    else:
        bb = max(_SUBLANE, _round_down(rows_wanted, _SUBLANE))  # multiple of 8

    # Lane-axis tile: multiple of 128 (ragged last block handled by cdiv grid).
    tn = min(N, max(_LANE, _round_down(target_elems // bb, _LANE)))
    return bb, tn


def _pick_seq_tile(S: int, D: int, itemsize: int) -> int:
    """Sequence tile for the (B, S, D) fallback layout."""
    target_elems = max(_SUBLANE * D, _TARGET_BLOCK_BYTES // itemsize)
    if S * D <= target_elems:
        return S                                       # == full dim: always legal
    return min(S, max(_SUBLANE, _round_down(target_elems // D, _SUBLANE)))


# ---------------------------------------------------------------------------
# Forward wrapper.
# ---------------------------------------------------------------------------
def positional_encoding_forward(x: jnp.ndarray, encoding: jnp.ndarray) -> jnp.ndarray:
    """x: (B, S, D); encoding: (max_len, D). Returns x + encoding[:S]."""
    B, S, D = x.shape
    enc = encoding[:S, :].astype(x.dtype)              # cast once (bf16-friendly)
    itemsize = jnp.dtype(x.dtype).itemsize
    N = S * D

    compiler_params = pltpu.CompilerParams(
        dimension_semantics=("parallel", "parallel"),  # 2-TC friendly on v7x
        vmem_limit_bytes=_VMEM_LIMIT_BYTES,
    )

    if N % _LANE == 0:
        # -------- lane-dense path: view each batch row as a flat 128-multiple
        # vector (pure elementwise add, so the reshape is a free view).
        bb, tn = _pick_flat_tiles(B, N, itemsize)
        x_flat = x.reshape(B, N)
        enc_flat = enc.reshape(1, N)

        # Grid: (lane tiles OUTER, batch tiles INNER).  The enc block index
        # depends only on the outer axis, so its DMA is skipped across the
        # inner batch loop (block index unchanged => no re-fetch).
        out_flat = pl.pallas_call(
            _add_flat_kernel,
            out_shape=jax.ShapeDtypeStruct((B, N), x.dtype),
            grid_spec=pltpu.PrefetchScalarGridSpec(
                num_scalar_prefetch=0,
                grid=(pl.cdiv(N, tn), pl.cdiv(B, bb)),
                in_specs=[
                    pl.BlockSpec((bb, tn), lambda j, i: (i, j)),
                    pl.BlockSpec((1, tn), lambda j, i: (0, j)),   # reused across batch tiles
                ],
                out_specs=pl.BlockSpec((bb, tn), lambda j, i: (i, j)),
            ),
            compiler_params=compiler_params,
        )(x_flat, enc_flat)
        return out_flat.reshape(B, S, D)

    # -------- fallback path: D stays the lane dim (full extent), tile over
    # the sequence, squeeze the batch block dim out of the kernel refs.
    ts = _pick_seq_tile(S, D, itemsize)
    return pl.pallas_call(
        _add_seq_kernel,
        out_shape=jax.ShapeDtypeStruct((B, S, D), x.dtype),
        grid_spec=pltpu.PrefetchScalarGridSpec(
            num_scalar_prefetch=0,
            grid=(B, pl.cdiv(S, ts)),
            in_specs=[
                pl.BlockSpec((None, ts, D), lambda b, s: (b, s, 0)),  # batch squeezed
                pl.BlockSpec((ts, D), lambda b, s: (s, 0)),
            ],
            out_specs=pl.BlockSpec((None, ts, D), lambda b, s: (b, s, 0)),
        ),
        compiler_params=compiler_params,
    )(x, enc)


# ---------------------------------------------------------------------------
# Demo / correctness check.
# ---------------------------------------------------------------------------
if __name__ == "__main__":
    # Shapes consistent with the module: batch=2, seq=8, d_model=32.
    B, S, D = 2, 8, 32
    MAX_LEN = 64

    key = jax.random.PRNGKey(0)
    x = jax.random.normal(key, (B, S, D), dtype=jnp.float32)
    encoding = generate_encoding(D, MAX_LEN)

    out = jax.block_until_ready(positional_encoding_forward(x, encoding))
    ref = x + encoding[None, :S, :]
    assert out.shape == (B, S, D)
    assert jnp.allclose(out, ref, atol=1e-6, rtol=1e-6)

    # Also exercise the non-lane-dense fallback path (S*D not a 128 multiple).
    B2, S2, D2 = 2, 5, 40
    x2 = jax.random.normal(jax.random.PRNGKey(0), (B2, S2, D2), dtype=jnp.float32)
    enc2 = generate_encoding(D2, 16)
    out2 = jax.block_until_ready(positional_encoding_forward(x2, enc2))
    ref2 = x2 + enc2[None, :S2, :]
    assert jnp.allclose(out2, ref2, atol=1e-6, rtol=1e-6)

    # Larger shape to exercise real multi-block tiling on both grid axes.
    B3, S3, D3 = 16, 512, 256
    x3 = jax.random.normal(jax.random.PRNGKey(0), (B3, S3, D3), dtype=jnp.float32)
    enc3 = generate_encoding(D3, S3)
    out3 = jax.block_until_ready(positional_encoding_forward(x3, enc3))
    ref3 = x3 + enc3[None, :S3, :]
    assert jnp.allclose(out3, ref3, atol=1e-6, rtol=1e-6)

    print("KERNEL_OK")
</pallas_src>

<mosaic_0001>
module attributes {stable_mosaic.version = 11 : i64} {
  func.func @_add_flat_kernel(%arg0: i32, %arg1: i32, %arg2: memref<2x256xf32, #tpu.memory_space<vmem>>, %arg3: memref<1x256xf32, #tpu.memory_space<vmem>>, %arg4: memref<2x256xf32, #tpu.memory_space<vmem>>) attributes {dimension_semantics = [#tpu.dimension_semantics<parallel>, #tpu.dimension_semantics<parallel>], iteration_bounds = array<i64: 1, 1>, scalar_prefetch = 0 : i64, scratch_operands = 0 : i64, tpu.core_type = #tpu.core_type<tc>, window_params = [{transform_indices = @transform_0, window_bounds = array<i64: 2, 256>}, {transform_indices = @transform_1, window_bounds = array<i64: 1, 256>}, {transform_indices = @transform_2, window_bounds = array<i64: 2, 256>}]} {
    %c0 = arith.constant 0 : index
    %c0_0 = arith.constant 0 : index
    %0 = vector.load %arg2[%c0, %c0_0] : memref<2x256xf32, #tpu.memory_space<vmem>>, vector<2x256xf32>
    %c0_1 = arith.constant 0 : index
    %c0_2 = arith.constant 0 : index
    %1 = vector.load %arg3[%c0_1, %c0_2] : memref<1x256xf32, #tpu.memory_space<vmem>>, vector<1x256xf32>
    %2 = vector.broadcast %1 : vector<1x256xf32> to vector<2x256xf32>
    %3 = arith.addf %0, %2 : vector<2x256xf32>
    %c0_3 = arith.constant 0 : index
    %c0_4 = arith.constant 0 : index
    %4 = vector.load %arg4[%c0_3, %c0_4] : memref<2x256xf32, #tpu.memory_space<vmem>>, vector<2x256xf32>
    tpu.vector_store %arg4[%c0_3, %c0_4], %3 {strides = array<i32>} : memref<2x256xf32, #tpu.memory_space<vmem>>, vector<2x256xf32>,
    return
  }
  func.func @transform_0(%arg0: i32, %arg1: i32) -> (i32, i32) {
    %c0_i32 = arith.constant 0 : i32
    return %arg1, %arg0 : i32, i32
  }
  func.func @transform_1(%arg0: i32, %arg1: i32) -> (i32, i32) {
    %c0_i32 = arith.constant 0 : i32
    %c0_i32_0 = arith.constant 0 : i32
    return %c0_i32, %arg0 : i32, i32
  }
  func.func @transform_2(%arg0: i32, %arg1: i32) -> (i32, i32) {
    %c0_i32 = arith.constant 0 : i32
    return %arg1, %arg0 : i32, i32
  }
}

</mosaic_0001>

<llo_original>
// kernel: tpu_custom_call.1
$region0: #{tpu_custom_call.1}
  #allocation0 [shape = 'u32[]', space=smem, size = 0x4, offset = 0x4, fixed_abs, tag = 'smem constant byte address 0x4 - core index']
  #allocation1 [shape = 'u32[72,128]{1,0:T(1,128)}', space=vmem, size = 0x9000, scoped, tag = 'internal scratch']
  %s0 = inlined_call_operand.hbm [shape: f32[2,256], index: 0, kind: input, shape index: {}]
  %s1 = inlined_call_operand.hbm [shape: f32[1,256], index: 1, kind: input, shape index: {}]
  %s2 = inlined_call_operand.hbm [shape: f32[2,256], index: 2, kind: output, shape index: {}]
  %s3 = sld [smem:[#allocation0]]
  $region26: #{tpu_custom_call.1} parent=0
    _
  %s5 = ssub.s32 1, %s3
  %s6 = scalar_select 0, %s5, %s3
  $region1: #{tpu_custom_call.1} parent=0
    #allocation2 [shape = 'u8[2048]{0}', space=vmem, size = 0x800, scoped, tag = 'input window, operand 0, single buffered']
    #allocation3 [shape = 's32[1]{0}', space=sflag, size = 0x4, scoped, tag = 'scoped memory for tpu_custom_call.1']
    #allocation4 [shape = 's32[1]{0}', space=sflag, size = 0x4, scoped, tag = 'scoped memory for tpu_custom_call.1']
    #allocation5 [shape = 'u8[1024]{0}', space=vmem, size = 0x400, scoped, tag = 'input window, operand 1, single buffered']
    #allocation6 [shape = 's32[1]{0}', space=sflag, size = 0x4, scoped, tag = 'scoped memory for tpu_custom_call.1']
    #allocation7 [shape = 'u8[2048]{0}', space=vmem, size = 0x800, scoped, tag = 'output window, operand 0, single buffered']
    %7 = vsyncpa [#allocation3], 0
    %8 = vsyncpa [#allocation6], 0
    %9 = vsyncpa [#allocation4], 0
    // Predicated region
    $region2: #{tpu_custom_call.1} parent=1 // pred_check
      _
    $region3: #{tpu_custom_call.1} parent=1 // pred_check_branch
      %11 = sbr.rel (0) target = $region5
    $region4: #{tpu_custom_call.1} parent=1 // pred_region
      %13 = vsyncadd [#allocation3], 0
      %s15 = sshll.u32 %s0, 4
      %s16 = int_to_ptr.hbm [resolvable:$true] %s15
      %s17 = sshll.u32 [#allocation2], 4
      %s18 = int_to_ptr.vmem [resolvable:$true] %s17
      %20 = dma.hbm_to_vmem [thread:$0]  %s16, 64, %s18, [#allocation3]
    $region5: #{tpu_custom_call.1} parent=1 // pred_fallthru
      _
    // Predicated region
    $region6: #{tpu_custom_call.1} parent=1 // pred_check
      _
    $region7: #{tpu_custom_call.1} parent=1 // pred_check_branch
      %22 = sbr.rel (0) target = $region9
    $region8: #{tpu_custom_call.1} parent=1 // pred_region
      %24 = vsyncadd [#allocation6], 0
      %s26 = sshll.u32 %s1, 4
      %s27 = int_to_ptr.hbm [resolvable:$true] %s26
      %s28 = sshll.u32 [#allocation5], 4
      %s29 = int_to_ptr.vmem [resolvable:$true] %s28
      %31 = dma.hbm_to_vmem [thread:$0]  %s27, 32, %s29, [#allocation6]
    $region9: #{tpu_custom_call.1} parent=1 // pred_fallthru
      _
    // Predicated region
    $region10: #{tpu_custom_call.1} parent=1 // pred_check
      _
    $region11: #{tpu_custom_call.1} parent=1 // pred_check_branch
      %33 = sbr.rel (0) target = $region13
    $region12: #{tpu_custom_call.1} parent=1 // pred_region
      %35 = dma.done [#allocation3], 64
    $region13: #{tpu_custom_call.1} parent=1 // pred_fallthru
      _
    // Predicated region
    $region14: #{tpu_custom_call.1} parent=1 // pred_check
      _
    $region15: #{tpu_custom_call.1} parent=1 // pred_check_branch
      %37 = sbr.rel (0) target = $region17
    $region16: #{tpu_custom_call.1} parent=1 // pred_region
      %39 = dma.done [#allocation6], 32
    $region17: #{tpu_custom_call.1} parent=1 // pred_fallthru
      _
    %v40 = vld [vmem:[#allocation2] sm:$0xf]
    %v41 = vld [vmem:[#allocation5] sm:$0x3]
    %v43 = vperm.slane %v41, 0
    %v44 = vperm.slane %v41, 1
    %v45 = vrot.slane %v44, 6
    %vm46 = vcmask 1041408
    %v47 = vsel %vm46, %v43, %v45
    %v49 = vadd.f32 %v40, %v47
    %50 = vst [vmem:[#allocation7] sm:$0xf] %v49
    // Predicated region
    $region18: #{tpu_custom_call.1} parent=1 // pred_check
      _
    $region19: #{tpu_custom_call.1} parent=1 // pred_check_branch
      %52 = sbr.rel (0) target = $region21
    $region20: #{tpu_custom_call.1} parent=1 // pred_region
      %54 = vsyncadd [#allocation4], 0
      %s56 = sshll.u32 [#allocation7], 4
      %s57 = int_to_ptr.vmem [resolvable:$true] %s56
      %s58 = sshll.u32 %s2, 4
      %s59 = int_to_ptr.hbm [resolvable:$true] %s58
      %61 = dma.vmem_to_hbm [thread:$0]  %s57, 64, %s59, [#allocation4]
    $region21: #{tpu_custom_call.1} parent=1 // pred_fallthru
      _
    // Predicated region
    $region22: #{tpu_custom_call.1} parent=1 // pred_check
      _
    $region23: #{tpu_custom_call.1} parent=1 // pred_check_branch
      %63 = sbr.rel (0) target = $region25
    $region24: #{tpu_custom_call.1} parent=1 // pred_region
      %65 = dma.done [#allocation4], 64
    $region25: #{tpu_custom_call.1} parent=1 // pred_fallthru
      _
    %66 = vsyncpa [#allocation3], 1
    %67 = vsyncpa [#allocation6], 1
    %68 = vsyncpa [#allocation4], 1

</llo_original>
